<compile_context>
chip_gen: v5e
topology: v5e:2x2
jax: 0.10.0
libtpu: 0.0.40
codegen_flags: <defaults>
</compile_context>

<pallas_src>
import functools

import jax
import jax.numpy as jnp
from jax import lax
from jax.experimental import pallas as pl
from jax.experimental.pallas import tpu as pltpu


def _round_up(x, m):
    return ((x + m - 1) // m) * m


def _lowest(dtype):
    dtype = jnp.dtype(dtype)
    if jnp.issubdtype(dtype, jnp.floating):
        return float("-inf")
    return int(jnp.iinfo(dtype).min)


# ---------------------------------------------------------------------------
# Fused path (tiny inputs): whole (R, L) array is one VMEM block, one launch.
# ---------------------------------------------------------------------------
def _global_max_pool_fused_kernel(x_ref, o_ref):
    # x_ref: (R, L); o_ref: (R, 1)
    o_ref[...] = jnp.max(x_ref[...], axis=-1, keepdims=True)


# ---------------------------------------------------------------------------
# Tiled path: grid = (row blocks ["parallel"], time blocks ["arbitrary"]).
# Per-lane running max lives in a (block_r, 128) VMEM scratch; per step the
# block is folded 128 lanes at a time with elementwise maximum (pure VPU).
# The tail mask and the single cross-lane reduce run only on the last step.
# ---------------------------------------------------------------------------
def _global_max_pool_tiled_kernel(x_ref, o_ref, acc_ref, *, rem, block_l):
    l = pl.program_id(1)
    n_l = pl.num_programs(1)
    neg = _lowest(acc_ref.dtype)
    n_chunks = block_l // 128

    @pl.when(l == 0)
    def _init():
        acc_ref[...] = jnp.full(acc_ref.shape, neg, acc_ref.dtype)

    def _accumulate(mask_tail):
        x = x_ref[...]                                    # (block_r, block_l)
        if mask_tail:
            # Neutralize lanes past the real sequence end (last block only).
            lane = lax.broadcasted_iota(jnp.int32, x.shape, 1)
            x = jnp.where(lane < rem, x, neg)
        folded = x[:, 0:128]                              # lane-group fold: VPU only
        for c in range(1, n_chunks):
            folded = jnp.maximum(folded, x[:, c * 128:(c + 1) * 128])
        acc_ref[...] = jnp.maximum(acc_ref[...], folded)

    if rem == 0:
        # L divides the block evenly: single unmasked hot path, no iota/where.
        _accumulate(False)
    else:
        @pl.when(l < n_l - 1)
        def _hot():
            _accumulate(False)

        @pl.when(l == n_l - 1)
        def _tail():
            _accumulate(True)

    @pl.when(l == n_l - 1)
    def _finalize():
        # One XLU reduce per row block for the whole kernel.
        o_ref[...] = jnp.max(acc_ref[...], axis=-1, keepdims=True)


def global_max_pool1d(x, *, max_block_bytes=4 << 20, fused_bytes=1 << 20):
    """x: (B, C, L) -> (B, C, 1); identical to F.max_pool1d(x, kernel_size=L)."""
    B, C, L = x.shape
    R = B * C
    itemsize = jnp.dtype(x.dtype).itemsize
    x2 = x.reshape(R, L)                                   # free reshape in HBM

    cost = pl.CostEstimate(flops=R * L, transcendentals=0,
                           bytes_accessed=R * L * itemsize + R * itemsize)

    if R * L * itemsize <= fused_bytes:
        out = pl.pallas_call(
            _global_max_pool_fused_kernel,
            out_shape=jax.ShapeDtypeStruct((R, 1), x.dtype),
            in_specs=[pl.BlockSpec(memory_space=pltpu.MemorySpace.VMEM)],
            out_specs=pl.BlockSpec(memory_space=pltpu.MemorySpace.VMEM),
            cost_estimate=cost,
        )(x2)
        return out.reshape(B, C, 1)

    # ---- Tiled, pipelined path -------------------------------------------
    row_sub = max(8, 32 // itemsize)          # sublane multiple: f32 8, bf16 16, i8 32
    # Lanes per block: >= one 128-lane tile, bounded so even a minimal row block
    # fits the byte budget, and the unrolled lane fold stays short (<= 256 chunks).
    lane_budget = (max_block_bytes // (row_sub * itemsize)) // 128 * 128
    block_l = int(max(128, min(_round_up(L, 128), min(lane_budget, 256 * 128))))
    row_budget = (max_block_bytes // (block_l * itemsize)) // row_sub * row_sub
    block_r = int(max(row_sub, min(_round_up(R, row_sub), row_budget)))
    grid_r = pl.cdiv(R, block_r)
    grid_l = pl.cdiv(L, block_l)

    # Long reduction axis but a single row block: split rows so the "parallel"
    # axis can feed both v7x TensorCores.
    if grid_r == 1 and grid_l > 1 and block_r >= 2 * row_sub:
        block_r = int(_round_up(-(-R // 2), row_sub))
        grid_r = pl.cdiv(R, block_r)

    rem = L % block_l                                      # 0 -> no tail masking

    out = pl.pallas_call(
        functools.partial(_global_max_pool_tiled_kernel, rem=rem, block_l=block_l),
        out_shape=jax.ShapeDtypeStruct((R, 1), x.dtype),
        grid=(grid_r, grid_l),
        in_specs=[pl.BlockSpec((block_r, block_l), lambda r, l: (r, l))],
        out_specs=pl.BlockSpec((block_r, 1), lambda r, l: (r, 0)),
        scratch_shapes=[pltpu.VMEM((block_r, 128), x.dtype)],
        compiler_params=pltpu.CompilerParams(
            dimension_semantics=("parallel", "arbitrary")),
        cost_estimate=cost,
    )(x2)
    return out.reshape(B, C, 1)


if __name__ == "__main__":
    key = jax.random.PRNGKey(0)
    k1, k2, k3, k4 = jax.random.split(key, 4)

    # 1) Small input (PyTorch layout (batch, channels, seq_len)) -> fused path.
    x = jax.random.normal(k1, (2, 32, 128), jnp.float32)
    out = jax.block_until_ready(jax.jit(global_max_pool1d)(x))
    assert out.shape == (2, 32, 1), out.shape
    if not jnp.array_equal(out, jnp.max(x, axis=-1, keepdims=True)):
        raise AssertionError("fused global max pool mismatches reference")

    # 2) Fused path with seq_len that is not a lane multiple.
    x_odd = jax.random.normal(k2, (2, 4, 50), jnp.float32)
    out_odd = jax.block_until_ready(jax.jit(global_max_pool1d)(x_odd))
    if not jnp.array_equal(out_odd, jnp.max(x_odd, axis=-1, keepdims=True)):
        raise AssertionError("fused (odd L) global max pool mismatches reference")

    # 3) Tiled path with a ragged tail (force the gridded path with a tiny budget).
    tiled = jax.jit(functools.partial(global_max_pool1d,
                                      max_block_bytes=4096, fused_bytes=0))
    x_long = jax.random.normal(k3, (2, 8, 300), jnp.float32)
    out_long = jax.block_until_ready(tiled(x_long))
    assert out_long.shape == (2, 8, 1), out_long.shape
    if not jnp.array_equal(out_long, jnp.max(x_long, axis=-1, keepdims=True)):
        raise AssertionError("tiled (ragged) global max pool mismatches reference")

    # 4) Tiled path, evenly divisible seq_len (no tail-mask code emitted).
    x_even = jax.random.normal(k4, (2, 8, 256), jnp.float32)
    out_even = jax.block_until_ready(tiled(x_even))
    if not jnp.array_equal(out_even, jnp.max(x_even, axis=-1, keepdims=True)):
        raise AssertionError("tiled (even) global max pool mismatches reference")

    print("KERNEL_OK")
</pallas_src>

<mosaic_0001>
module attributes {stable_mosaic.version = 11 : i64} {
  func.func @_global_max_pool_fused_kernel(%arg0: memref<64x128xf32, #tpu.memory_space<vmem>>, %arg1: memref<64x1xf32, #tpu.memory_space<vmem>>) attributes {dimension_semantics = [], scalar_prefetch = 0 : i64, scratch_operands = 0 : i64, tpu.core_type = #tpu.core_type<tc>} {
    %c0 = arith.constant 0 : index
    %c0_0 = arith.constant 0 : index
    %0 = vector.load %arg0[%c0, %c0_0] : memref<64x128xf32, #tpu.memory_space<vmem>>, vector<64x128xf32>
    %cst = arith.constant dense<0xFF800000> : vector<64xf32>
    %1 = vector.multi_reduction <maximumf>, %0, %cst [1] : vector<64x128xf32> to vector<64xf32>
    %2 = vector.shape_cast %1 : vector<64xf32> to vector<64x1xf32>
    %c0_1 = arith.constant 0 : index
    %c0_2 = arith.constant 0 : index
    %3 = vector.load %arg1[%c0_1, %c0_2] : memref<64x1xf32, #tpu.memory_space<vmem>>, vector<64x1xf32>
    tpu.vector_store %arg1[%c0_1, %c0_2], %2 {strides = array<i32>} : memref<64x1xf32, #tpu.memory_space<vmem>>, vector<64x1xf32>,
    return
  }
}

</mosaic_0001>

<llo_original>
// kernel: global_max_pool1d.1
$region0: #{global_max_pool1d.1}
  #allocation0 [shape = 'u32[]', space=smem, size = 0x4, offset = 0x4, fixed_abs, tag = 'smem constant byte address 0x4 - core index']
  #allocation1 [shape = 'u32[72,128]{1,0:T(1,128)}', space=vmem, size = 0x9000, scoped, tag = 'internal scratch']
  %s0 = inlined_call_operand.hbm [shape: f32[64,128], index: 0, kind: input, shape index: {}]
  %s1 = inlined_call_operand.vmem [shape: f32[64,1], index: 1, kind: output, shape index: {}]
  %s2 = sld [smem:[#allocation0]]
  $region18: #{global_max_pool1d.1} parent=0
    _
  %s4 = ssub.s32 1, %s2
  %s5 = scalar_select 0, %s4, %s2
  $region1: #{global_max_pool1d.1} parent=0
    #allocation2 [shape = 'u8[32768]{0}', space=vmem, size = 0x8000, scoped, tag = 'input window, operand 0, single buffered']
    #allocation3 [shape = 's32[1]{0}', space=sflag, size = 0x4, scoped, tag = 'scoped memory for global_max_pool1d.1']
    %6 = vsyncpa [#allocation3], 0
    // Predicated region
    $region2: #{global_max_pool1d.1} parent=1 // pred_check
      _
    $region3: #{global_max_pool1d.1} parent=1 // pred_check_branch
      %8 = sbr.rel (0) target = $region5
    $region4: #{global_max_pool1d.1} parent=1 // pred_region
      %10 = vsyncadd [#allocation3], 0
      %s11 = sshll.u32 %s0, 4
      %s12 = int_to_ptr.hbm [resolvable:$true] %s11
      %s13 = sshll.u32 [#allocation2], 4
      %s14 = int_to_ptr.vmem [resolvable:$true] %s13
      %19 = dma.hbm_to_vmem [thread:$0]  %s12, 1024, %s14, [#allocation3], 128, 128, 8
    $region5: #{global_max_pool1d.1} parent=1 // pred_fallthru
      _
    // Predicated region
    $region6: #{global_max_pool1d.1} parent=1 // pred_check
      _
    $region7: #{global_max_pool1d.1} parent=1 // pred_check_branch
      %21 = sbr.rel (0) target = $region9
    $region8: #{global_max_pool1d.1} parent=1 // pred_region
      %23 = dma.done [#allocation3], 1024
    $region9: #{global_max_pool1d.1} parent=1 // pred_fallthru
      _
    %v24 = vld [vmem:[#allocation2] sm:$0xff]
    %v25 = vld [vmem:[#allocation2 + $0x8] sm:$0xff]
    %v26 = vld [vmem:[#allocation2 + $0x10] sm:$0xff]
    %v27 = vld [vmem:[#allocation2 + $0x18] sm:$0xff]
    %v28 = vld [vmem:[#allocation2 + $0x20] sm:$0xff]
    %v29 = vld [vmem:[#allocation2 + $0x28] sm:$0xff]
    %v30 = vld [vmem:[#allocation2 + $0x30] sm:$0xff]
    %v31 = vld [vmem:[#allocation2 + $0x38] sm:$0xff]
    %32 = vmax.xlane.f32.xlu0 %v24
    %v33 = vpop.xlane.xlu0 %32
    %34 = vmax.xlane.f32.xlu0 %v25
    %v35 = vpop.xlane.xlu0 %34
    %36 = vmax.xlane.f32.xlu0 %v26
    %v37 = vpop.xlane.xlu0 %36
    %38 = vmax.xlane.f32.xlu0 %v27
    %v39 = vpop.xlane.xlu0 %38
    %40 = vmax.xlane.f32.xlu0 %v28
    %v41 = vpop.xlane.xlu0 %40
    %42 = vmax.xlane.f32.xlu0 %v29
    %v43 = vpop.xlane.xlu0 %42
    %44 = vmax.xlane.f32.xlu0 %v30
    %v45 = vpop.xlane.xlu0 %44
    %46 = vmax.xlane.f32.xlu0 %v31
    %v47 = vpop.xlane.xlu0 %46
    %vm48 = vcmask 7168
    %49 = vst.msk [vmem:[%s1] sm:$0xff] %vm48, %v33
    %50 = vst.msk [vmem:[%s1 + $0x8] sm:$0xff] %vm48, %v35
    %51 = vst.msk [vmem:[%s1 + $0x10] sm:$0xff] %vm48, %v37
    %52 = vst.msk [vmem:[%s1 + $0x18] sm:$0xff] %vm48, %v39
    %53 = vst.msk [vmem:[%s1 + $0x20] sm:$0xff] %vm48, %v41
    %54 = vst.msk [vmem:[%s1 + $0x28] sm:$0xff] %vm48, %v43
    %55 = vst.msk [vmem:[%s1 + $0x30] sm:$0xff] %vm48, %v45
    %56 = vst.msk [vmem:[%s1 + $0x38] sm:$0xff] %vm48, %v47
    // Predicated region
    $region10: #{global_max_pool1d.1} parent=1 // pred_check
      _
    $region11: #{global_max_pool1d.1} parent=1 // pred_check_branch
      %58 = sbr.rel (0) target = $region13
    $region12: #{global_max_pool1d.1} parent=1 // pred_region
      _
    $region13: #{global_max_pool1d.1} parent=1 // pred_fallthru
      _
    // Predicated region
    $region14: #{global_max_pool1d.1} parent=1 // pred_check
      _
    $region15: #{global_max_pool1d.1} parent=1 // pred_check_branch
      %60 = sbr.rel (0) target = $region17
    $region16: #{global_max_pool1d.1} parent=1 // pred_region
      _
    $region17: #{global_max_pool1d.1} parent=1 // pred_fallthru
      _
    %61 = vsyncpa [#allocation3], 1

</llo_original>
